<compile_context>
chip_gen: v7x
topology: tpu7x:2x2x1
jax: 0.10.0
libtpu: 0.0.40
codegen_flags: <defaults>
</compile_context>

<pallas_src>
import jax
import jax.numpy as jnp
from jax.experimental import pallas as pl
from jax.experimental.pallas import tpu as pltpu


def _round_up(x, m):
    return ((x + m - 1) // m) * m


def gmf_kernel(u_ref, i_ref, w_ref, b_ref, o_ref):
    # u_ref / i_ref: (E, TB) lane-dense gathered embeddings (batch on lanes).
    # w_ref:         (1, E)  linear weight, PyTorch layout (VMEM, resident).
    # b_ref:         (1,)    linear bias (SMEM scalar).
    # o_ref:         (1, TB) lane-dense output slab.
    prod = u_ref[...] * i_ref[...]                                   # (E, TB) on VPU
    # MXU contraction over E, transpose-free: (1, E) @ (E, TB) -> (1, TB).
    preds = jnp.dot(w_ref[...], prod, preferred_element_type=jnp.float32)
    o_ref[...] = preds + b_ref[0]                                    # scalar bias add


def gmf_forward(users, items, user_tbl, item_tbl, w, b, *,
                block_b=8192, use_bf16=False):
    """users/items: (B,) int32; user_tbl: (n_user, E); item_tbl: (n_item, E);
    w: (1, E); b: (1,).  Returns (B, 1) float32, matching the PyTorch forward."""
    B = int(users.shape[0])
    E = int(user_tbl.shape[1])

    # ---- Batch tiling: tb must be a multiple of 128 (lane axis of output). ----
    block_b = max(128, (int(block_b) // 128) * 128)
    b_pad0 = _round_up(B, 128)
    tb = min(block_b, b_pad0)
    # v7x megacore: prefer >= 2 grid steps when the batch allows it.
    if tb >= b_pad0 and b_pad0 >= 256:
        tb = _round_up(b_pad0 // 2, 128)
    b_pad = _round_up(B, tb)
    grid = b_pad // tb

    # ---- Pad the (cheap) index vectors, not the gathered f32 slabs. ----
    if b_pad != B:
        pad = b_pad - B
        users = jnp.pad(users, (0, pad))          # pad with id 0 (valid row)
        items = jnp.pad(items, (0, pad))          # padded outputs sliced off below

    # ---- Gather only the needed rows (tables never leave HBM wholesale),
    #      then present them lane-dense as (E, b_pad).
    #      mode="clip" clamps out-of-range ids (PyTorch would raise). ----
    user_emb = jnp.take(user_tbl, users, axis=0, mode="clip").T      # (E, b_pad)
    item_emb = jnp.take(item_tbl, items, axis=0, mode="clip").T      # (E, b_pad)

    if use_bf16:
        user_emb = user_emb.astype(jnp.bfloat16)
        item_emb = item_emb.astype(jnp.bfloat16)
        w = w.astype(jnp.bfloat16)
    in_bytes = 2 if use_bf16 else 4

    cost = pl.CostEstimate(
        flops=4 * b_pad * E,                      # elementwise mul + dot MACs
        transcendentals=0,
        bytes_accessed=2 * b_pad * E * in_bytes + E * in_bytes + b_pad * 4,
    )

    out_row = pl.pallas_call(
        gmf_kernel,
        out_shape=jax.ShapeDtypeStruct((1, b_pad), jnp.float32),
        grid=(grid,),
        in_specs=[
            pl.BlockSpec((E, tb), lambda i: (0, i)),                 # user slab
            pl.BlockSpec((E, tb), lambda i: (0, i)),                 # item slab
            pl.BlockSpec((1, E), lambda i: (0, 0)),                  # weight (resident)
            pl.BlockSpec(memory_space=pltpu.MemorySpace.SMEM),       # bias scalar
        ],
        out_specs=pl.BlockSpec((1, tb), lambda i: (0, i)),           # lane-dense out
        compiler_params=pltpu.CompilerParams(
            dimension_semantics=("parallel",)),                      # megacore on v7x
        cost_estimate=cost,
    )(user_emb, item_emb, w, b.reshape((1,)).astype(jnp.float32))

    return out_row[0, :B][:, None]                                   # (B, 1)


if __name__ == "__main__":
    n_user, n_item, n_emb = 10, 12, 8
    batch = 8

    key = jax.random.PRNGKey(0)
    k_u, k_i, k_w, k_b, k_uid, k_iid = jax.random.split(key, 6)

    # Parameter init mirroring the PyTorch __init__:
    #   Embedding weights ~ N(0, 1); Linear weight ~ U[0, 1);
    #   Linear bias: default PyTorch U(-1/sqrt(E), 1/sqrt(E)).
    user_tbl = jax.random.normal(k_u, (n_user, n_emb), dtype=jnp.float32)
    item_tbl = jax.random.normal(k_i, (n_item, n_emb), dtype=jnp.float32)
    w = jax.random.uniform(k_w, (1, n_emb), dtype=jnp.float32)
    bound = 1.0 / (n_emb ** 0.5)
    b = jax.random.uniform(k_b, (1,), minval=-bound, maxval=bound,
                           dtype=jnp.float32)

    users = jax.random.randint(k_uid, (batch,), 0, n_user, dtype=jnp.int32)
    items = jax.random.randint(k_iid, (batch,), 0, n_item, dtype=jnp.int32)

    out = gmf_forward(users, items, user_tbl, item_tbl, w, b)
    out = jax.block_until_ready(out)

    # Pure-JAX reference (f32 path).
    ref = (user_tbl[users] * item_tbl[items]) @ w.T + b
    assert out.shape == (batch, 1)
    assert jnp.allclose(out, ref, atol=1e-5, rtol=1e-5)

    # Also exercise the bf16 bandwidth-saving path (looser tolerance).
    out_bf16 = jax.block_until_ready(
        gmf_forward(users, items, user_tbl, item_tbl, w, b, use_bf16=True))
    assert jnp.allclose(out_bf16, ref, atol=5e-2, rtol=5e-2)

    print("KERNEL_OK")
</pallas_src>

<mosaic_0001>
module attributes {stable_mosaic.version = 11 : i64} {
  func.func @gmf_kernel(%arg0: i32, %arg1: memref<8x128xf32, #tpu.memory_space<vmem>>, %arg2: memref<8x128xf32, #tpu.memory_space<vmem>>, %arg3: memref<1x8xf32, #tpu.memory_space<vmem>>, %arg4: memref<1xf32, #tpu.memory_space<smem>>, %arg5: memref<1x128xf32, #tpu.memory_space<vmem>>) attributes {dimension_semantics = [#tpu.dimension_semantics<parallel>], iteration_bounds = array<i64: 1>, scalar_prefetch = 0 : i64, scratch_operands = 0 : i64, tpu.core_type = #tpu.core_type<tc>, window_params = [{transform_indices = @transform_0, window_bounds = array<i64: 8, 128>}, {transform_indices = @transform_1, window_bounds = array<i64: 8, 128>}, {pipeline_mode = #tpu.pipeline_mode<synchronous>, transform_indices = @transform_2, window_bounds = array<i64: 1, 8>}, {transform_indices = @transform_3, window_bounds = array<i64: 1>}, {transform_indices = @transform_4, window_bounds = array<i64: 1, 128>}]} {
    %c0 = arith.constant 0 : index
    %c0_0 = arith.constant 0 : index
    %0 = vector.load %arg1[%c0, %c0_0] : memref<8x128xf32, #tpu.memory_space<vmem>>, vector<8x128xf32>
    %c0_1 = arith.constant 0 : index
    %c0_2 = arith.constant 0 : index
    %1 = vector.load %arg2[%c0_1, %c0_2] : memref<8x128xf32, #tpu.memory_space<vmem>>, vector<8x128xf32>
    %2 = arith.mulf %0, %1 : vector<8x128xf32>
    %c0_3 = arith.constant 0 : index
    %c0_4 = arith.constant 0 : index
    %3 = vector.load %arg3[%c0_3, %c0_4] : memref<1x8xf32, #tpu.memory_space<vmem>>, vector<1x8xf32>
    %cst = arith.constant dense<0.000000e+00> : vector<1x128xf32>
    %4 = tpu.matmul %3, %2, %cst {dimension_numbers = #tpu.dot_dimension_numbers<[1], [0], [0], [1], [0, 0, 1, 1], [], []>} : vector<1x8xf32>, vector<8x128xf32>, vector<1x128xf32> -> vector<1x128xf32>
    %c0_5 = arith.constant 0 : index
    %5 = memref.load %arg4[%c0_5] : memref<1xf32, #tpu.memory_space<smem>>
    %6 = vector.broadcast %5 : f32 to vector<1x128xf32>
    %7 = arith.addf %4, %6 : vector<1x128xf32>
    %c0_6 = arith.constant 0 : index
    %c0_7 = arith.constant 0 : index
    %8 = vector.load %arg5[%c0_6, %c0_7] : memref<1x128xf32, #tpu.memory_space<vmem>>, vector<1x128xf32>
    tpu.vector_store %arg5[%c0_6, %c0_7], %7 {strides = array<i32>} : memref<1x128xf32, #tpu.memory_space<vmem>>, vector<1x128xf32>,
    return
  }
  func.func @transform_0(%arg0: i32) -> (i32, i32) {
    %c0_i32 = arith.constant 0 : i32
    %c0_i32_0 = arith.constant 0 : i32
    return %c0_i32, %arg0 : i32, i32
  }
  func.func @transform_1(%arg0: i32) -> (i32, i32) {
    %c0_i32 = arith.constant 0 : i32
    %c0_i32_0 = arith.constant 0 : i32
    return %c0_i32, %arg0 : i32, i32
  }
  func.func @transform_2(%arg0: i32) -> (i32, i32) {
    %c0_i32 = arith.constant 0 : i32
    %c0_i32_0 = arith.constant 0 : i32
    %c0_i32_1 = arith.constant 0 : i32
    return %c0_i32, %c0_i32_0 : i32, i32
  }
  func.func @transform_3(%arg0: i32) -> i32 {
    %c0_i32 = arith.constant 0 : i32
    %c0_i32_0 = arith.constant 0 : i32
    return %c0_i32 : i32
  }
  func.func @transform_4(%arg0: i32) -> (i32, i32) {
    %c0_i32 = arith.constant 0 : i32
    %c0_i32_0 = arith.constant 0 : i32
    return %c0_i32, %arg0 : i32, i32
  }
}

</mosaic_0001>

<llo_original>
// kernel: tpu_custom_call.1
$region0: #{tpu_custom_call.1}
  #allocation0 [shape = 'u32[]', space=smem, size = 0x4, offset = 0x4, fixed_abs, tag = 'smem constant byte address 0x4 - core index']
  #allocation1 [shape = 'u32[144,128]{1,0:T(1,128)}', space=vmem, size = 0x12000, scoped, tag = 'internal scratch']
  #allocation2 [shape = 'f32[1]{0:T(128)S(6)}', space=smem, size = 0x200, scoped, tag = 'scoped memory for tpu_custom_call.1']
  %s0 = inlined_call_operand.hbm [shape: f32[8,128], index: 0, kind: input, shape index: {}]
  %s1 = inlined_call_operand.hbm [shape: f32[8,128], index: 1, kind: input, shape index: {}]
  %s2 = inlined_call_operand.vmem [shape: f32[1,8], index: 2, kind: input, shape index: {}]
  %s3 = inlined_call_operand.<no memory space> [shape: f32[1], index: 3, kind: input, shape index: {}]
  %s4 = inlined_call_operand.hbm [shape: f32[1,128], index: 4, kind: output, shape index: {}]
  %s5 = sld [smem:[#allocation0]]
  $region34: #{tpu_custom_call.1} parent=0
    _
  %s7 = ssub.s32 1, %s5
  %s8 = scalar_select 0, %s7, %s5
  %9 = sst [smem:[#allocation2]] %s3
  $region1: #{tpu_custom_call.1} parent=0
    #allocation3 [shape = 'u8[4096]{0}', space=vmem, size = 0x1000, scoped, tag = 'input window, operand 0, single buffered']
    #allocation4 [shape = 's32[1]{0}', space=sflag, size = 0x4, scoped, tag = 'scoped memory for tpu_custom_call.1']
    #allocation5 [shape = 's32[1]{0}', space=sflag, size = 0x4, scoped, tag = 'scoped memory for tpu_custom_call.1']
    #allocation6 [shape = 'u8[4096]{0}', space=vmem, size = 0x1000, scoped, tag = 'input window, operand 1, single buffered']
    #allocation7 [shape = 's32[1]{0}', space=sflag, size = 0x4, scoped, tag = 'scoped memory for tpu_custom_call.1']
    #allocation8 [shape = 'u8[512]{0}', space=vmem, size = 0x400, scoped, tag = 'output window, operand 0, single buffered']
    %10 = vsyncpa [#allocation4], 0
    %11 = vsyncpa [#allocation7], 0
    %12 = vsyncpa [#allocation5], 0
    // Predicated region
    $region2: #{tpu_custom_call.1} parent=1 // pred_check
      _
    $region3: #{tpu_custom_call.1} parent=1 // pred_check_branch
      %14 = sbr.rel (0) target = $region5
    $region4: #{tpu_custom_call.1} parent=1 // pred_region
      %s16 = ssub.s32 128, 128
      %17 = vsyncadd [#allocation4], %s16
      %s19 = sshll.u32 [#allocation3], 4
      %s20 = int_to_ptr.vmem [resolvable:$true] %s19
      %22 = dma.hbm_to_vmem [thread:$0]  %s0, 128, %s20, [#allocation4]
    $region5: #{tpu_custom_call.1} parent=1 // pred_fallthru
      _
    // Predicated region
    $region6: #{tpu_custom_call.1} parent=1 // pred_check
      _
    $region7: #{tpu_custom_call.1} parent=1 // pred_check_branch
      %24 = sbr.rel (0) target = $region9
    $region8: #{tpu_custom_call.1} parent=1 // pred_region
      %s26 = ssub.s32 128, 128
      %27 = vsyncadd [#allocation7], %s26
      %s29 = sshll.u32 [#allocation6], 4
      %s30 = int_to_ptr.vmem [resolvable:$true] %s29
      %32 = dma.hbm_to_vmem [thread:$0]  %s1, 128, %s30, [#allocation7]
    $region9: #{tpu_custom_call.1} parent=1 // pred_fallthru
      _
    // Predicated region
    $region10: #{tpu_custom_call.1} parent=1 // pred_check
      _
    $region11: #{tpu_custom_call.1} parent=1 // pred_check_branch
      %34 = sbr.rel (0) target = $region13
    $region12: #{tpu_custom_call.1} parent=1 // pred_region
      _
    $region13: #{tpu_custom_call.1} parent=1 // pred_fallthru
      _
    // Predicated region
    $region14: #{tpu_custom_call.1} parent=1 // pred_check
      _
    $region15: #{tpu_custom_call.1} parent=1 // pred_check_branch
      %36 = sbr.rel (0) target = $region17
    $region16: #{tpu_custom_call.1} parent=1 // pred_region
      _
    $region17: #{tpu_custom_call.1} parent=1 // pred_fallthru
      _
    // Predicated region
    $region18: #{tpu_custom_call.1} parent=1 // pred_check
      _
    $region19: #{tpu_custom_call.1} parent=1 // pred_check_branch
      %38 = sbr.rel (0) target = $region21
    $region20: #{tpu_custom_call.1} parent=1 // pred_region
      %39 = dma.done [#allocation4], 128
    $region21: #{tpu_custom_call.1} parent=1 // pred_fallthru
      _
    // Predicated region
    $region22: #{tpu_custom_call.1} parent=1 // pred_check
      _
    $region23: #{tpu_custom_call.1} parent=1 // pred_check_branch
      %41 = sbr.rel (0) target = $region25
    $region24: #{tpu_custom_call.1} parent=1 // pred_region
      %42 = dma.done [#allocation7], 128
    $region25: #{tpu_custom_call.1} parent=1 // pred_fallthru
      _
    %v43 = vld [vmem:[#allocation3] sm:$0xff]
    %v44 = vld [vmem:[#allocation6] sm:$0xff]
    %v45 = vmul.f32 %v43, %v44
    %v46 = vld [vmem:[%s2] sm:$0x1]
    %s47 = sld [smem:[#allocation2]]
    %v48 = vstv %s47
    %vm49 = vcmask 64512
    %v51 = vsel %vm49, %v46, 0
    %53 = vmatprep.subr.mxu0 0.0
    %54 = vmatpush1.msra.mxu0 %v45
    %55 = vmatprep.subr.mxu0 0.0
    %56 = vmatpush1.msra.mxu0 0.0
    %57 = vmatprep.subr.mxu0 0.0
    %58 = vmatpush1.msra.mxu0 0.0
    %59 = vmatprep.subr.mxu0 0.0
    %60 = vmatpush1.msra.mxu0 0.0
    %61 = vmatprep.subr.mxu0 0.0
    %62 = vmatpush1.msra.mxu0 0.0
    %63 = vmatprep.subr.mxu0 0.0
    %64 = vmatpush1.msra.mxu0 0.0
    %65 = vmatprep.subr.mxu0 0.0
    %66 = vmatpush1.msra.mxu0 0.0
    %67 = vmatprep.subr.mxu0 0.0
    %68 = vmatpush1.msra.mxu0 0.0
    %69 = vmatprep.subr.mxu0 0.0
    %70 = vmatpush1.msra.mxu0 0.0
    %71 = vmatprep.subr.mxu0 0.0
    %72 = vmatpush1.msra.mxu0 0.0
    %73 = vmatprep.subr.mxu0 0.0
    %74 = vmatpush1.msra.mxu0 0.0
    %75 = vmatprep.subr.mxu0 0.0
    %76 = vmatpush1.msra.mxu0 0.0
    %77 = vmatprep.subr.mxu0 0.0
    %78 = vmatpush1.msra.mxu0 0.0
    %79 = vmatprep.subr.mxu0 0.0
    %80 = vmatpush1.msra.mxu0 0.0
    %81 = vmatprep.subr.mxu0 0.0
    %82 = vmatpush1.msra.mxu0 0.0
    %83 = vmatprep.subr.mxu0 0.0
    %84 = vmatpush1.msra.mxu0 0.0
    %85 = vmatprep.subr.mxu0 0.0
    %86 = vmatpush1.msra.mxu0 0.0
    %87 = vmatprep.subr.mxu0 0.0
    %88 = vmatpush1.msra.mxu0 0.0
    %89 = vmatprep.subr.mxu0 0.0
    %90 = vmatpush1.msra.mxu0 0.0
    %91 = vmatprep.subr.mxu0 0.0
    %92 = vmatpush1.msra.mxu0 0.0
    %93 = vmatprep.subr.mxu0 0.0
    %94 = vmatpush1.msra.mxu0 0.0
    %95 = vmatprep.subr.mxu0 0.0
    %96 = vmatpush1.msra.mxu0 0.0
    %97 = vmatprep.subr.mxu0 0.0
    %98 = vmatpush1.msra.mxu0 0.0
    %99 = vmatprep.subr.mxu0 0.0
    %100 = vmatpush1.msra.mxu0 0.0
    %101 = vmatprep.subr.mxu0 0.0
    %102 = vmatpush1.msra.mxu0 0.0
    %103 = vmatprep.subr.mxu0 0.0
    %104 = vmatpush1.msra.mxu0 0.0
    %105 = vmatprep.subr.mxu0 0.0
    %106 = vmatpush1.msra.mxu0 0.0
    %107 = vmatprep.subr.mxu0 0.0
    %108 = vmatpush1.msra.mxu0 0.0
    %109 = vmatprep.subr.mxu0 0.0
    %110 = vmatpush1.msra.mxu0 0.0
    %111 = vmatprep.subr.mxu0 0.0
    %112 = vmatpush1.msra.mxu0 0.0
    %113 = vmatprep.subr.mxu0 0.0
    %114 = vmatpush1.msra.mxu0 0.0
    %115 = vmatprep.subr.mxu0 0.0
    %116 = vmatpush1.msra.mxu0 0.0
    %117 = vmatprep.mubr.f32.mxu0 0.0
    %118 = vmatmul.mubr.f32.gmra.mrb[0].mxu0 %v51
    %v119 = vpop.f32.mrb[0].mxu0
    %v120 = vadd.f32 %v48, %v119
    %v121 = vpop.f32.mrb[0].mxu0
    %122 = vdwg.mxu0
    %123 = vst [vmem:[#allocation8] sm:$0x1] %v120
    // Predicated region
    $region26: #{tpu_custom_call.1} parent=1 // pred_check
      _
    $region27: #{tpu_custom_call.1} parent=1 // pred_check_branch
      %125 = sbr.rel (0) target = $region29
    $region28: #{tpu_custom_call.1} parent=1 // pred_region
      %s127 = ssub.s32 16, 16
      %128 = vsyncadd [#allocation5], %s127
      %s130 = sshll.u32 [#allocation8], 4
      %s131 = int_to_ptr.vmem [resolvable:$true] %s130
      %133 = dma.vmem_to_hbm [thread:$0]  %s131, 16, %s4, [#allocation5]
    $region29: #{tpu_custom_call.1} parent=1 // pred_fallthru
      _
    // Predicated region
    $region30: #{tpu_custom_call.1} parent=1 // pred_check
      _
    $region31: #{tpu_custom_call.1} parent=1 // pred_check_branch
      %135 = sbr.rel (0) target = $region33
    $region32: #{tpu_custom_call.1} parent=1 // pred_region
      %136 = dma.done [#allocation5], 16
    $region33: #{tpu_custom_call.1} parent=1 // pred_fallthru
      _
    %137 = vsyncpa [#allocation4], 1
    %138 = vsyncpa [#allocation7], 1
    %139 = vsyncpa [#allocation5], 1

</llo_original>
